<compile_context>
chip_gen: v5e
topology: v5e:2x2
jax: 0.10.0
libtpu: 0.0.40
codegen_flags: <defaults>
</compile_context>

<pallas_src>
import functools
import math

import jax
import jax.numpy as jnp
from jax import lax
from jax.experimental import pallas as pl
from jax.experimental.pallas import tpu as pltpu


_LANE = 128
_K_SINGLE_MAX = 2048            # padded-K threshold for the single-reduction-step path
_TK_MULTI = 512                 # K tile for the deep-K fallback
_VMEM_BUDGET = 26 * 2**20       # resident working-set target (v7x: 64 MiB physical VMEM)


def _round_up(x, m):
    return (x + m - 1) // m * m


def _vmem_bytes(single, TM, TN, TK, Kp, Cp):
    """Rough per-kernel VMEM working set (double-buffered pipeline buffers)."""
    n_out = Cp if single else TN
    lhs = 2 * TM * TK * 2                       # bf16 patches
    w = 2 * Kp * n_out * 2                      # bf16 weight (resident)
    out = 2 * TM * n_out * 4
    acc = 0 if single else TM * TN * 4
    keep = 2 * TM * _LANE * 4                   # (TM, 1) tile, lane-padded
    bias = 2 * 8 * n_out * 4
    return lhs + w + out + acc + keep + bias


def _plan(M, Kdim, cout):
    """Tile selection. Returns (single_k, TM, TN, TK, Mp, Kp, Cp, vmem_estimate)."""
    # Lane-dense output stores; 256-wide N tiles fill the v6e/v7x MXU.
    Cp = _round_up(cout, 128) if cout <= 128 else _round_up(cout, 256)
    single = (Kdim <= _K_SINGLE_MAX) and (Cp <= 1024)
    if single:
        Kp = _round_up(Kdim, _LANE)
        TK, TN = Kp, Cp                         # one reduction step, full-width output tile
    else:
        TK = _TK_MULTI
        Kp = _round_up(Kdim, TK)
        TN = 256 if Cp % 256 == 0 else 128
    # Big row tiles (mem-bound kernels reach ~85% of HBM roofline near 512-wide tiles);
    # multiple of 16 so the bf16 LHS packs cleanly along sublanes.
    TM = min(512, _round_up(M, 16))
    while _vmem_bytes(single, TM, TN, TK, Kp, Cp) > _VMEM_BUDGET and TM > 64:
        TM //= 2
    # Keep >= 2 row blocks so both v7x TensorCores get work under megacore sharding.
    if _round_up(M, TM) // TM < 2 and M > 16:
        TM = max(16, _round_up((M + 1) // 2, 16))
    Mp = _round_up(M, TM)
    return single, TM, TN, TK, Mp, Kp, Cp, _vmem_bytes(single, TM, TN, TK, Kp, Cp)


def _compiler_params(sem, vmem_estimate):
    params = dict(dimension_semantics=sem)
    if vmem_estimate > 16 * 2**20:              # above v5e's scoped-VMEM default
        params["vmem_limit_bytes"] = int(min(48 * 2**20,
                                             max(32 * 2**20, 2 * vmem_estimate)))
    return pltpu.CompilerParams(**params)


def _extract_patches(x, k, s):
    """x: (N, Hp, Wp, C) already zero-padded. Returns ((N*OH*OW, k*k*C), OH, OW)."""
    N, Hp, Wp, C = x.shape
    OH = (Hp - k) // s + 1
    OW = (Wp - k) // s + 1
    cols = []
    for kh in range(k):
        for kw in range(k):
            cols.append(x[:, kh:kh + s * OH:s, kw:kw + s * OW:s, :])
    patches = jnp.stack(cols, axis=3)            # (N, OH, OW, k*k, C)
    return patches.reshape(N * OH * OW, k * k * C), OH, OW


def _window_sum(a, k, s, OH, OW):
    """a: (N, Hp, Wp) zero-padded. k x k window sum with stride s -> (N, OH, OW)."""
    total = jnp.zeros((a.shape[0], OH, OW), a.dtype)
    for kh in range(k):
        for kw in range(k):
            total = total + a[:, kh:kh + s * OH:s, kw:kw + s * OW:s]
    return total


# ---------------------------------------------------------------------------
# Pallas kernels: conv-as-matmul (bf16 MXU, f32 acc) + fused partial-conv epilogue
# ---------------------------------------------------------------------------
def _pconv_single_k_kernel(inv_ref, x_ref, w_ref, bias_ref, keep_ref, out_ref):
    """Single reduction step: whole weight resident, no accumulator scratch."""
    acc = jnp.dot(x_ref[...], w_ref[...], preferred_element_type=jnp.float32)
    out_ref[...] = (acc * inv_ref[0, 0] + bias_ref[...]) * keep_ref[...]


def _pconv_multi_k_kernel(TK, inv_ref, x_ref, w_ref, bias_ref, keep_ref, out_ref, acc_ref):
    """Deep-K path: K-tiled accumulation; full-K weight slab is resident per j block."""
    kk = pl.program_id(2)

    @pl.when(kk == 0)
    def _():
        acc_ref[...] = jnp.zeros_like(acc_ref)

    k0 = pl.multiple_of(kk * TK, TK)
    acc_ref[...] += jnp.dot(x_ref[...], w_ref[pl.ds(k0, TK), :],
                            preferred_element_type=jnp.float32)

    @pl.when(kk == pl.num_programs(2) - 1)
    def _():
        out_ref[...] = (acc_ref[...] * inv_ref[0, 0] + bias_ref[...]) * keep_ref[...]


def _pconv_matmul(inv_max, xm_p, w_p, bias_p, keep_p, plan):
    single, TM, TN, TK, Mp, Kp, Cp, est = plan
    smem = pl.BlockSpec(memory_space=pltpu.MemorySpace.SMEM)
    if single:
        # 1-D grid over row blocks; weight/bias block index is constant -> DMA'd once;
        # the LHS patches stream through exactly once.
        return pl.pallas_call(
            _pconv_single_k_kernel,
            out_shape=jax.ShapeDtypeStruct((Mp, Cp), jnp.float32),
            grid=(Mp // TM,),
            in_specs=[smem,                                          # 1/max(output_mask)
                      pl.BlockSpec((TM, Kp), lambda i: (i, 0)),      # patches (bf16)
                      pl.BlockSpec((Kp, Cp), lambda i: (0, 0)),      # weight, resident
                      pl.BlockSpec((1, Cp), lambda i: (0, 0)),       # bias
                      pl.BlockSpec((TM, 1), lambda i: (i, 0))],      # keep (0/1)
            out_specs=pl.BlockSpec((TM, Cp), lambda i: (i, 0)),
            compiler_params=_compiler_params(("parallel",), est),
        )(inv_max, xm_p, w_p, bias_p, keep_p)
    # Deep-K fallback: j (cout blocks) outermost so the full-K weight slab stays
    # resident across the entire row loop; kk innermost is the reduction axis.
    return pl.pallas_call(
        functools.partial(_pconv_multi_k_kernel, TK),
        out_shape=jax.ShapeDtypeStruct((Mp, Cp), jnp.float32),
        grid=(Cp // TN, Mp // TM, Kp // TK),
        in_specs=[smem,                                              # 1/max(output_mask)
                  pl.BlockSpec((TM, TK), lambda j, i, kk: (i, kk)),  # patches (bf16)
                  pl.BlockSpec((Kp, TN), lambda j, i, kk: (0, j)),   # weight, full-K per j
                  pl.BlockSpec((1, TN), lambda j, i, kk: (0, j)),    # bias
                  pl.BlockSpec((TM, 1), lambda j, i, kk: (i, 0))],   # keep (0/1)
        out_specs=pl.BlockSpec((TM, TN), lambda j, i, kk: (i, j)),
        scratch_shapes=[pltpu.VMEM((TM, TN), jnp.float32)],
        compiler_params=_compiler_params(("parallel", "parallel", "arbitrary"), est),
    )(inv_max, xm_p, w_p, bias_p, keep_p)


# ---------------------------------------------------------------------------
# PartialConv.forward
# ---------------------------------------------------------------------------
def partial_conv(x, mask, weight, bias, stride, padding):
    """PartialConv.forward.

    x, mask : (N, Cin, H, W) float32   (NCHW, PyTorch convention)
    weight  : (Cout, Cin, k, k) float32
    bias    : (Cout,) float32 or None
    Returns (output, output_mask):
      output      : (N, Cout, OH, OW) float32
      output_mask : (N, 1, OH, OW) float32 — all Cout channels of the PyTorch
                    output_mask are identical; broadcast if the full shape is needed.
    """
    N, cin, H, W = x.shape
    cout, _, k, _ = weight.shape
    s, p = stride, padding
    if bias is None:
        bias = jnp.zeros((cout,), jnp.float32)

    # NCHW -> NHWC (channel-last, lane-dense).
    x_nhwc = jnp.transpose(x, (0, 2, 3, 1))
    m_nhwc = jnp.transpose(mask, (0, 2, 3, 1))

    # im2col of (input * mask), cast to bf16 for the MXU (f32 accumulation in-kernel).
    xm_pad = jnp.pad((x_nhwc * m_nhwc).astype(jnp.bfloat16),
                     ((0, 0), (p, p), (p, p), (0, 0)))
    xm_patches, OH, OW = _extract_patches(xm_pad, k, s)
    M = N * OH * OW
    Kdim = k * k * cin

    # --- mask bookkeeping: cheap f32 glue, no Cin-blown-up mask im2col --------
    # mask_conv has all-ones weights, so mask_conv(mask)  = window-sum of the per-pixel
    # channel-sum of the mask; mask_conv(ones) = cin * (#in-bounds taps);
    # static_mask_conv(mask) = channel-sum at the kernel-center tap.
    csum = jnp.sum(m_nhwc, axis=-1)                               # (N, H, W)
    csum_pad = jnp.pad(csum, ((0, 0), (p, p), (p, p)))
    msum = _window_sum(csum_pad, k, s, OH, OW)                    # (N, OH, OW)
    ones_pad = jnp.pad(jnp.ones((1, H, W), jnp.float32),
                       ((0, 0), (p, p), (p, p)))
    osum = cin * _window_sum(ones_pad, k, s, OH, OW)              # (1, OH, OW)
    c0 = k // 2
    static = csum_pad[:, c0:c0 + s * OH:s, c0:c0 + s * OW:s]      # (N, OH, OW)
    out_mask = jnp.maximum(msum / osum, static / cin)             # (N, OH, OW)

    mask_max = jnp.max(out_mask)                                  # global scalar
    # eps guard: all-hole input -> finite scale, keep==0 everywhere -> output is 0
    # (matches PyTorch masked_fill_) instead of NaN from 0 * inf.
    inv_max = (1.0 / jnp.maximum(mask_max, 1e-30)).reshape(1, 1).astype(jnp.float32)
    keep = (out_mask != 0.0).astype(jnp.float32).reshape(M, 1)    # 0/1 hole indicator

    # --- padding to tile boundaries -------------------------------------------
    plan = _plan(M, Kdim, cout)
    _, TM, TN, TK, Mp, Kp, Cp, _ = plan
    xm_p = jnp.pad(xm_patches, ((0, Mp - M), (0, Kp - Kdim)))
    w_p = jnp.pad(jnp.transpose(weight, (2, 3, 1, 0))
                  .reshape(Kdim, cout).astype(jnp.bfloat16),
                  ((0, Kp - Kdim), (0, Cp - cout)))
    bias_p = jnp.pad(bias.astype(jnp.float32), (0, Cp - cout)).reshape(1, Cp)
    keep_p = jnp.pad(keep, ((0, Mp - M), (0, 0)))

    out_p = _pconv_matmul(inv_max, xm_p, w_p, bias_p, keep_p, plan)

    out = out_p[:M, :cout].reshape(N, OH, OW, cout)
    out_nchw = jnp.transpose(out, (0, 3, 1, 2))
    return out_nchw, out_mask[:, None, :, :]


# ---------------------------------------------------------------------------
# Pure-JAX f32 reference (mirrors PartialConv.forward) for correctness check
# ---------------------------------------------------------------------------
def _partial_conv_ref(x, mask, weight, bias, stride, padding):
    cout, cin, k, _ = weight.shape
    dn = ('NCHW', 'OIHW', 'NCHW')
    pad = [(padding, padding), (padding, padding)]

    def conv(inp, w):
        return lax.conv_general_dilated(inp, w, (stride, stride), pad,
                                        dimension_numbers=dn)

    if bias is None:
        bias = jnp.zeros((cout,), jnp.float32)
    b = bias.reshape(1, -1, 1, 1)
    output = conv(x * mask, weight) + b
    ones_w = jnp.ones_like(weight)
    static_w = jnp.zeros_like(weight).at[:, :, k // 2, k // 2].set(1.0)
    out_mask = jnp.maximum(conv(mask, ones_w) / conv(jnp.ones_like(mask), ones_w),
                           conv(mask, static_w) / cin)
    holes = out_mask == 0.0
    mask_max = jnp.max(out_mask)
    pre = (output - b) / mask_max + b
    return jnp.where(holes, 0.0, pre), out_mask


if __name__ == "__main__":
    key = jax.random.PRNGKey(0)
    kx, km, kw1, kb1, kw2, kb2, kx3, km3, kw3, kb3 = jax.random.split(key, 10)

    # Layer A/B: small shapes matching the module (decoder 3x3/s1/p1, encoder 7x7/s2/p3).
    N, CIN, H, W = 2, 4, 16, 16
    COUT = 8
    x = jax.random.normal(kx, (N, CIN, H, W), jnp.float32)
    hole = (jax.random.uniform(km, (N, 1, H, W)) > 0.25).astype(jnp.float32)
    mask = jnp.broadcast_to(hole, (N, CIN, H, W))

    wA = jax.random.normal(kw1, (COUT, CIN, 3, 3), jnp.float32) * math.sqrt(2.0 / (CIN * 9))
    bA = jax.random.normal(kb1, (COUT,), jnp.float32) * 0.1
    wB = jax.random.normal(kw2, (COUT, CIN, 7, 7), jnp.float32) * math.sqrt(2.0 / (CIN * 49))
    bB = jax.random.normal(kb2, (COUT,), jnp.float32) * 0.1

    # Layer C: deep-Cin 3x3 layer (k*k*Cin > 2048) exercising the multi-K accumulator path.
    N3, CIN3, H3, W3, COUT3 = 1, 256, 8, 8, 16
    x3 = jax.random.normal(kx3, (N3, CIN3, H3, W3), jnp.float32)
    hole3 = (jax.random.uniform(km3, (N3, 1, H3, W3)) > 0.25).astype(jnp.float32)
    mask3 = jnp.broadcast_to(hole3, (N3, CIN3, H3, W3))
    wC = jax.random.normal(kw3, (COUT3, CIN3, 3, 3), jnp.float32) * math.sqrt(2.0 / (CIN3 * 9))
    bC = jax.random.normal(kb3, (COUT3,), jnp.float32) * 0.1

    fwd = jax.jit(partial_conv, static_argnames=("stride", "padding"))
    outA, omA = fwd(x, mask, wA, bA, stride=1, padding=1)
    outB, omB = fwd(x, mask, wB, bB, stride=2, padding=3)
    outC, omC = fwd(x3, mask3, wC, bC, stride=1, padding=1)
    jax.block_until_ready((outA, omA, outB, omB, outC, omC))

    refA, romA = _partial_conv_ref(x, mask, wA, bA, 1, 1)
    refB, romB = _partial_conv_ref(x, mask, wB, bB, 2, 3)
    refC, romC = _partial_conv_ref(x3, mask3, wC, bC, 1, 1)

    assert outA.shape == (N, COUT, H, W) and omA.shape == (N, 1, H, W)
    assert outB.shape == (N, COUT, H // 2, W // 2) and omB.shape == (N, 1, H // 2, W // 2)
    assert outC.shape == (N3, COUT3, H3, W3) and omC.shape == (N3, 1, H3, W3)
    for o in (outA, outB, outC):
        assert bool(jnp.all(jnp.isfinite(o)))
    assert bool(jnp.allclose(jnp.broadcast_to(omA, romA.shape), romA, rtol=1e-5, atol=1e-5))
    assert bool(jnp.allclose(jnp.broadcast_to(omB, romB.shape), romB, rtol=1e-5, atol=1e-5))
    assert bool(jnp.allclose(jnp.broadcast_to(omC, romC.shape), romC, rtol=1e-5, atol=1e-5))
    assert bool(jnp.allclose(outA, refA, rtol=5e-2, atol=5e-2))   # bf16 matmul tolerance
    assert bool(jnp.allclose(outB, refB, rtol=5e-2, atol=5e-2))
    assert bool(jnp.allclose(outC, refC, rtol=5e-2, atol=5e-2))
    print("KERNEL_OK")
</pallas_src>

<mosaic_0001>
module attributes {stable_mosaic.version = 11 : i64} {
  func.func @_pconv_single_k_kernel(%arg0: i32, %arg1: memref<1x1xf32, #tpu.memory_space<smem>>, %arg2: memref<256x128xbf16, #tpu.memory_space<vmem>>, %arg3: memref<128x128xbf16, #tpu.memory_space<vmem>>, %arg4: memref<1x128xf32, #tpu.memory_space<vmem>>, %arg5: memref<256x1xf32, #tpu.memory_space<vmem>>, %arg6: memref<256x128xf32, #tpu.memory_space<vmem>>) attributes {dimension_semantics = [#tpu.dimension_semantics<parallel>], iteration_bounds = array<i64: 2>, scalar_prefetch = 0 : i64, scratch_operands = 0 : i64, tpu.core_type = #tpu.core_type<tc>, window_params = [{transform_indices = @transform_0, window_bounds = array<i64: 1, 1>}, {transform_indices = @transform_1, window_bounds = array<i64: 256, 128>}, {pipeline_mode = #tpu.pipeline_mode<synchronous>, transform_indices = @transform_2, window_bounds = array<i64: 128, 128>}, {pipeline_mode = #tpu.pipeline_mode<synchronous>, transform_indices = @transform_3, window_bounds = array<i64: 1, 128>}, {transform_indices = @transform_4, window_bounds = array<i64: 256, 1>}, {transform_indices = @transform_5, window_bounds = array<i64: 256, 128>}]} {
    %c0 = arith.constant 0 : index
    %c0_0 = arith.constant 0 : index
    %0 = vector.load %arg2[%c0, %c0_0] : memref<256x128xbf16, #tpu.memory_space<vmem>>, vector<256x128xbf16>
    %c0_1 = arith.constant 0 : index
    %c0_2 = arith.constant 0 : index
    %1 = vector.load %arg3[%c0_1, %c0_2] : memref<128x128xbf16, #tpu.memory_space<vmem>>, vector<128x128xbf16>
    %cst = arith.constant dense<0.000000e+00> : vector<256x128xf32>
    %2 = tpu.matmul %0, %1, %cst {dimension_numbers = #tpu.dot_dimension_numbers<[1], [0], [0], [1], [0, 0, 1, 1], [], []>} : vector<256x128xbf16>, vector<128x128xbf16>, vector<256x128xf32> -> vector<256x128xf32>
    %c0_3 = arith.constant 0 : index
    %c0_4 = arith.constant 0 : index
    %3 = memref.load %arg1[%c0_3, %c0_4] : memref<1x1xf32, #tpu.memory_space<smem>>
    %4 = vector.broadcast %3 : f32 to vector<256x128xf32>
    %5 = arith.mulf %2, %4 : vector<256x128xf32>
    %c0_5 = arith.constant 0 : index
    %c0_6 = arith.constant 0 : index
    %6 = vector.load %arg4[%c0_5, %c0_6] : memref<1x128xf32, #tpu.memory_space<vmem>>, vector<1x128xf32>
    %7 = vector.broadcast %6 : vector<1x128xf32> to vector<256x128xf32>
    %8 = arith.addf %5, %7 : vector<256x128xf32>
    %c0_7 = arith.constant 0 : index
    %c0_8 = arith.constant 0 : index
    %9 = vector.load %arg5[%c0_7, %c0_8] : memref<256x1xf32, #tpu.memory_space<vmem>>, vector<256x1xf32>
    %10 = vector.broadcast %9 : vector<256x1xf32> to vector<256x128xf32>
    %11 = arith.mulf %8, %10 : vector<256x128xf32>
    %c0_9 = arith.constant 0 : index
    %c0_10 = arith.constant 0 : index
    %12 = vector.load %arg6[%c0_9, %c0_10] : memref<256x128xf32, #tpu.memory_space<vmem>>, vector<256x128xf32>
    tpu.vector_store %arg6[%c0_9, %c0_10], %11 {strides = array<i32>} : memref<256x128xf32, #tpu.memory_space<vmem>>, vector<256x128xf32>,
    return
  }
  func.func @transform_0(%arg0: i32) -> (i32, i32) {
    %c0_i32 = arith.constant 0 : i32
    %c0_i32_0 = arith.constant 0 : i32
    %c0_i32_1 = arith.constant 0 : i32
    return %c0_i32, %c0_i32_0 : i32, i32
  }
  func.func @transform_1(%arg0: i32) -> (i32, i32) {
    %c0_i32 = arith.constant 0 : i32
    %c0_i32_0 = arith.constant 0 : i32
    return %arg0, %c0_i32 : i32, i32
  }
  func.func @transform_2(%arg0: i32) -> (i32, i32) {
    %c0_i32 = arith.constant 0 : i32
    %c0_i32_0 = arith.constant 0 : i32
    %c0_i32_1 = arith.constant 0 : i32
    return %c0_i32, %c0_i32_0 : i32, i32
  }
  func.func @transform_3(%arg0: i32) -> (i32, i32) {
    %c0_i32 = arith.constant 0 : i32
    %c0_i32_0 = arith.constant 0 : i32
    %c0_i32_1 = arith.constant 0 : i32
    return %c0_i32, %c0_i32_0 : i32, i32
  }
  func.func @transform_4(%arg0: i32) -> (i32, i32) {
    %c0_i32 = arith.constant 0 : i32
    %c0_i32_0 = arith.constant 0 : i32
    return %arg0, %c0_i32 : i32, i32
  }
  func.func @transform_5(%arg0: i32) -> (i32, i32) {
    %c0_i32 = arith.constant 0 : i32
    %c0_i32_0 = arith.constant 0 : i32
    return %arg0, %c0_i32 : i32, i32
  }
}

</mosaic_0001>

<llo_original>
// kernel: partial_conv.1
$region0: #{partial_conv.1}
  #allocation0 [shape = 'u32[]', space=smem, size = 0x4, offset = 0x4, fixed_abs, tag = 'smem constant byte address 0x4 - core index']
  #allocation1 [shape = 'u32[72,128]{1,0:T(1,128)}', space=vmem, size = 0x9000, scoped, tag = 'internal scratch']
  #allocation2 [shape = 'f32[1,1]{1,0:T(1,128)S(6)}', space=smem, size = 0x200, scoped, tag = 'scoped memory for partial_conv.1']
  %s0 = inlined_call_operand.<no memory space> [shape: f32[1,1], index: 0, kind: input, shape index: {}]
  %s1 = inlined_call_operand.vmem [shape: bf16[512,128], index: 1, kind: input, shape index: {}]
  %s2 = inlined_call_operand.vmem [shape: bf16[128,128], index: 2, kind: input, shape index: {}]
  %s3 = inlined_call_operand.vmem [shape: f32[1,128], index: 3, kind: input, shape index: {}]
  %s4 = inlined_call_operand.vmem [shape: f32[512,1], index: 4, kind: input, shape index: {}]
  %s5 = inlined_call_operand.vmem [shape: f32[512,128], index: 5, kind: output, shape index: {}]
  %s6 = sld [smem:[#allocation0]]
  $region53: #{partial_conv.1} parent=0
    _
  %s8 = ssub.s32 1, %s6
  %s9 = scalar_select 0, %s8, %s6
  %10 = sst [smem:[#allocation2]] %s0
  loop: start=0, step=1, limit=4
  $region2: #{partial_conv.1} parent=0 // loop_pre_header
    _
  $region3: #{partial_conv.1} parent=0 // loop_header
    %s12 = sphi 0, %s16
    %p13 = scmp.ge.s32.totalorder %s12, 4
    %s20 = sphi 0, %s20
    %s22 = sphi 0, %s20
    %s23 = sphi 0, %s22
    %s37 = sphi 0, %s23
    %s43 = sphi 0, %s45
    %s46 = sphi 0, %s43
    %s47 = sphi 0, %s46
    %s63 = sphi 0, %s47
    %s67 = sphi 0, %s67
    %s69 = sphi 0, %s67
    %s70 = sphi 0, %s69
    %s84 = sphi 0, %s70
    %s88 = sphi 0, %s88
    %s90 = sphi 0, %s88
    %s91 = sphi 0, %s90
    %s105 = sphi 0, %s91
    %s111 = sphi 0, %s113
    %s114 = sphi 0, %s111
    %s115 = sphi 0, %s114
    %s131 = sphi 0, %s115
    %s137 = sphi 0, %s139
    %s140 = sphi 0, %s137
    %s141 = sphi 0, %s140
    %s157 = sphi 0, %s141
  $region4: #{partial_conv.1} parent=0 // loop_header_branch
    %15 = sbr.rel (%p13) target = $region8
  $region5: #{partial_conv.1} parent=0 // loop_body
    %s17 = ssub.s32 %s12, 1
    %s18 = ssub.s32 %s12, 2
    %s19 = sadd.s32 %s12, 1
    %s21 = sadd.s32 %s20, 1
    %p24 = scmp.eq.s32.totalorder %s12, 1
    %p25 = scmp.ne.s32.totalorder %s20, %s22
    %p26 = scmp.eq.s32.totalorder %s12, 0
    %p27 = por %p25, %p26
    %p28 = scmp.ne.s32.totalorder %s20, %s22
    %p29 = scmp.eq.s32.totalorder %s17, 1
    %p30 = por %p28, %p29
    %p31 = scmp.ne.s32.totalorder %s22, %s23
    %p32 = scmp.eq.s32.totalorder %s17, 0
    %p33 = por %p31, %p32
    %p34 = scmp.ne.s32.totalorder %s22, %s23
    %p35 = scmp.eq.s32.totalorder %s18, 1
    %p36 = por %p34, %p35
    %p38 = scmp.ne.s32.totalorder %s23, %s37
    %p39 = scmp.eq.s32.totalorder %s18, 0
    %p40 = por %p38, %p39
    %s41 = ssub.s32 %s12, %s19
    %p42 = scmp.eq.s32.totalorder %s41, 0
    %s44 = sadd.s32 %s43, 1
    %s45 = scalar_select %p42, %s43, %s44
    %p48 = pneg %p42
    %p49 = scmp.eq.s32.totalorder %s12, 1
    %p50 = por %p48, %p49
    %p51 = scmp.ne.s32.totalorder %s43, %s46
    %p52 = scmp.eq.s32.totalorder %s12, 0
    %p53 = por %p51, %p52
    %p54 = scmp.ne.s32.totalorder %s43, %s46
    %p55 = scmp.eq.s32.totalorder %s17, 1
    %p56 = por %p54, %p55
    %p57 = scmp.ne.s32.totalorder %s46, %s47
    %p58 = scmp.eq.s32.totalorder %s17, 0
    %p59 = por %p57, %p58
    %p60 = scmp.ne.s32.totalorder %s46, %s47
    %p61 = scmp.eq.s32.totalorder %s18, 1
    %p62 = por %p60, %p61
    %p64 = scmp.ne.s32.totalorder %s47, %s63
    %p65 = scmp.eq.s32.totalorder %s18, 0
    %p66 = por %p64, %p65
    %s68 = sadd.s32 %s67, 1
    %p71 = scmp.eq.s32.totalorder %s12, 1
    %p72 = scmp.ne.s32.totalorder %s67, %s69
    %p73 = scmp.eq.s32.totalorder %s12, 0
    %p74 = por %p72, %p73
    %p75 = scmp.ne.s32.totalorder %s67, %s69
    %p76 = scmp.eq.s32.totalorder %s17, 1
    %p77 = por %p75, %p76
    %p78 = scmp.ne.s32.totalorder %s69, %s70
    %p79 = scmp.eq.s32.totalorder %s17, 0
    %p80 = por %p78, %p79
    %p81 = scmp.ne.s32.totalorder %s69, %s70
    %p82 = scmp.eq.s32.totalorder %s18, 1
    %p83 = por %p81, %p82
    %p85 = scmp.ne.s32.totalorder %s70, %s84
    %p86 = scmp.eq.s32.totalorder %s18, 0
    %p87 = por %p85, %p86
    %s89 = sadd.s32 %s88, 1
    %p92 = scmp.eq.s32.totalorder %s12, 1
    %p93 = scmp.ne.s32.totalorder %s88, %s90
    %p94 = scmp.eq.s32.totalorder %s12, 0
    %p95 = por %p93, %p94
    %p96 = scmp.ne.s32.totalorder %s88, %s90
    %p97 = scmp.eq.s32.totalorder %s17, 1
    %p98 = por %p96, %p97
    %p99 = scmp.ne.s32.totalorder %s90, %s91
    %p100 = scmp.eq.s32.totalorder %s17, 0
    %p101 = por %p99, %p100
    %p102 = scmp.ne.s32.totalorder %s90, %s91
    %p103 = scmp.eq.s32.totalorder %s18, 1
    %p104 = por %p102, %p103
    %p106 = scmp.ne.s32.totalorder %s91, %s105
    %p107 = scmp.eq.s32.totalorder %s18, 0
    %p108 = por %p106, %p107
    %s109 = ssub.s32 %s12, %s19
    %p110 = scmp.eq.s32.totalorder %s109, 0
    %s112 = sadd.s32 %s111, 1
    %s113 = scalar_select %p110, %s111, %s112
    %p116 = pneg %p110
    %p117 = scmp.eq.s32.totalorder %s12, 1
    %p118 = por %p116, %p117
    %p119 = scmp.ne.s32.totalorder %s111, %s114
    %p120 = scmp.eq.s32.totalorder %s12, 0
    %p121 = por %p119, %p120
    %p122 = scmp.ne.s32.totalorder %s111, %s114
    %p123 = scmp.eq.s32.totalorder %s17, 1
    %p124 = por %p122, %p123
    %p125 = scmp.ne.s32.totalorder %s114, %s115
    %p126 = scmp.eq.s32.totalorder %s17, 0
    %p127 = por %p125, %p126
    %p128 = scmp.ne.s32.totalorder %s114, %s115
    %p129 = scmp.eq.s32.totalorder %s18, 1
    %p130 = por %p128, %p129
    %p132 = scmp.ne.s32.totalorder %s115, %s131
    %p133 = scmp.eq.s32.totalorder %s18, 0
    %p134 = por %p132, %p133
    %s135 = ssub.s32 %s12, %s19
    %p136 = scmp.eq.s32.totalorder %s135, 0
    %s138 = sadd.s32 %s137, 1
    %s139 = scalar_select %p136, %s137, %s138
    %p142 = pneg %p136
    %p143 = scmp.eq.s32.totalorder %s12, 1
    %p144 = por %p142, %p143
    %p145 = scmp.ne.s32.totalorder %s137, %s140
    %p146 = scmp.eq.s32.totalorder %s12, 0
    %p147 = por %p145, %p146
    %p148 = scmp.ne.s32.totalorder %s137, %s140
    %p149 = scmp.eq.s32.totalorder %s17, 1
    %p150 = por %p148, %p149
    %p151 = scmp.ne.s32.totalorder %s140, %s141
    %p152 = scmp.eq.s32.totalorder %s17, 0
    %p153 = por %p151, %p152
    %p154 = scmp.ne.s32.totalorder %s140, %s141
    %p155 = scmp.eq.s32.totalorder %s18, 1
    %p156 = por %p154, %p155
    %p158 = scmp.ne.s32.totalorder %s141, %s157
    %p159 = scmp.eq.s32.totalorder %s18, 0
    %p160 = por %p158, %p159
    %p161 = scmp.le.s32.totalorder 1, %s12
    %p162 = scmp.lt.s32.totalorder %s12, 3
    %p163 = pnand %p161, %p162
    %p164 = pneg %p163
    // Predicated region
    $region9: #{partial_conv.1} parent=5 // pred_check
      _
    $region10: #{partial_conv.1} parent=5 // pred_check_branch
      %166 = sbr.rel (%p163) target = $region12
    $region11: #{partial_conv.1} parent=5 // pred_region
      %s167 = ssub.s32 %s12, 1
      // Predicated region
      $region13: #{partial_conv.1} parent=11 // pred_check
        %p168 = pneg %p33
      $region14: #{partial_conv.1} parent=11 // pred_check_branch
        %170 = sbr.rel (%p168) target = $region16
      $region15: #{partial_conv.1} parent=11 // pred_region
        _
      $region16: #{partial_conv.1} parent=11 // pred_fallthru
        _
      // Predicated region
      $region17: #{partial_conv.1} parent=11 // pred_check
        %p171 = pneg %p80
      $region18: #{partial_conv.1} parent=11 // pred_check_branch
        %173 = sbr.rel (%p171) target = $region20
      $region19: #{partial_conv.1} parent=11 // pred_region
        _
      $region20: #{partial_conv.1} parent=11 // pred_fallthru
        _
      // Predicated region
      $region21: #{partial_conv.1} parent=11 // pred_check
        %p174 = pneg %p101
      $region22: #{partial_conv.1} parent=11 // pred_check_branch
        %176 = sbr.rel (%p174) target = $region24
      $region23: #{partial_conv.1} parent=11 // pred_region
        _
      $region24: #{partial_conv.1} parent=11 // pred_fallthru
        _
    $region12: #{partial_conv.1} parent=5 // pred_fallthru
      _
    %p177 = scmp.lt.s32.totalorder %s12, 2
    // Predicated region
    $region25: #{partial_conv.1} parent=5 // pred_check
      %p178 = pneg %p177
    $region26: #{partial_conv.1} parent=5 // pred_check_branch
      %180 = sbr.rel (%p178) target = $region28
    $region27: #{partial_conv.1} parent=5 // pred_region
      // Predicated region
      $region29: #{partial_conv.1} parent=27 // pred_check
        %p181 = pneg %p53
      $region30: #{partial_conv.1} parent=27 // pred_check_branch
        %183 = sbr.rel (%p181) target = $region32
      $region31: #{partial_conv.1} parent=27 // pred_region
        %s184 = smul.u32 32, %s12
        %p185 = scmp.lt.s32.totalorder %s184, 63
        %s186 = scalar_select %p185, %s184, 63
        %s187 = smul.addr %s186, 4
        %s188 = scalar_lea.vmem %s1, %s187
        %s189 = smul.u32 32, %s12
      $region32: #{partial_conv.1} parent=27 // pred_fallthru
        _
      // Predicated region
      $region33: #{partial_conv.1} parent=27 // pred_check
        %p190 = pneg %p121
      $region34: #{partial_conv.1} parent=27 // pred_check_branch
        %192 = sbr.rel (%p190) target = $region36
      $region35: #{partial_conv.1} parent=27 // pred_region
        %s193 = smul.u32 32, %s12
        %p194 = scmp.lt.s32.totalorder %s193, 63
        %s195 = scalar_select %p194, %s193, 63
        %s196 = smul.addr %s195, 8
        %s197 = scalar_lea.vmem %s4, %s196
        %s198 = smul.u32 32, %s12
      $region36: #{partial_conv.1} parent=27 // pred_fallthru
        _
    $region28: #{partial_conv.1} parent=5 // pred_fallthru
      _
    %p199 = scmp.le.s32.totalorder 1, %s12
    %p200 = scmp.lt.s32.totalorder %s12, 3
    %p201 = pnand %p199, %p200
    %p202 = pneg %p201
    // Predicated region
    $region37: #{partial_conv.1} parent=5 // pred_check
      _
    $region38: #{partial_conv.1} parent=5 // pred_check_branch
      %204 = sbr.rel (%p201) target = $region40
    $region39: #{partial_conv.1} parent=5 // pred_region
      %s205 = ssub.s32 %s12, 1
      %p206 = pneg %p33
      %p207 = pneg %p30
      %s208 = smul.u32 32, %s17
      %p209 = scmp.lt.s32.totalorder %s208, 63
      %s210 = scalar_select %p209, %s208, 63
      %s211 = smul.addr %s210, 4
      %s212 = scalar_lea.vmem %s1, %s211
      %p213 = pneg %p59
      %p214 = pneg %p56
      %p215 = pneg %p80
      %p216 = pneg %p77
      %p217 = pneg %p101
      %p218 = pneg %p98
      %s219 = smul.u32 32, %s17
      %p220 = scmp.lt.s32.totalorder %s219, 63
      %s221 = scalar_select %p220, %s219, 63
      %s222 = smul.addr %s221, 8
      %s223 = scalar_lea.vmem %s4, %s222
      %p224 = pneg %p127
      %p225 = pneg %p124
      %p226 = pneg %p153
      %p227 = pneg %p150
      %s228 = smul.u32 32, %s17
      %p229 = scmp.lt.s32.totalorder %s228, 63
      %s230 = scalar_select %p229, %s228, 63
      %s231 = smul.addr %s230, 8
      %s232 = scalar_lea.vmem %s5, %s231
      %s233 = smul.u32 32, %s17
      %p234 = scmp.lt.s32.totalorder %s233, 63
      %s235 = scalar_select %p234, %s233, 63
      %s236 = smul.addr %s235, 4
      %s237 = scalar_lea.vmem %s1, %s236
      %s238 = smul.u32 32, %s17
      %s239 = smul.u32 32, %s17
      %p240 = scmp.lt.s32.totalorder %s239, 63
      %s241 = scalar_select %p240, %s239, 63
      %s242 = smul.addr %s241, 8
      %s243 = scalar_lea.vmem %s4, %s242
      %s244 = smul.u32 32, %s17
      %s245 = smul.u32 32, %s17
      %p246 = scmp.lt.s32.totalorder %s245, 63
      %s247 = scalar_select %p246, %s245, 63
      %s248 = smul.addr %s247, 8
      %s249 = scalar_lea.vmem %s5, %s248
      %s250 = smul.u32 32, %s17
      %v251 = vld [vmem:[%s237] sm:$0xf]
      %v252 = vld [vmem:[%s237 + $0x4] sm:$0xf]
      %v253 = vld [vmem:[%s237 + $0x8] sm:$0xf]
      %v254 = vld [vmem:[%s237 + $0xc] sm:$0xf]
      %v255 = vld [vmem:[%s237 + $0x10] sm:$0xf]
      %v256 = vld [vmem:[%s237 + $0x14] sm:$0xf]
      %v257 = vld [vmem:[%s237 + $0x18] sm:$0xf]
      %v258 = vld [vmem:[%s237 + $0x1c] sm:$0xf]
      %v259 = vld [vmem:[%s237 + $0x20] sm:$0xf]
      %v260 = vld [vmem:[%s237 + $0x24] sm:$0xf]
      %v261 = vld [vmem:[%s237 + $0x28] sm:$0xf]
      %v262 = vld [vmem:[%s237 + $0x2c] sm:$0xf]
      %v263 = vld [vmem:[%s237 + $0x30] sm:$0xf]
      %v264 = vld [vmem:[%s237 + $0x34] sm:$0xf]
      %v265 = vld [vmem:[%s237 + $0x38] sm:$0xf]
      %v266 = vld [vmem:[%s237 + $0x3c] sm:$0xf]
      %v267 = vld [vmem:[%s237 + $0x40] sm:$0xf]
      %v268 = vld [vmem:[%s237 + $0x44] sm:$0xf]
      %v269 = vld [vmem:[%s237 + $0x48] sm:$0xf]
      %v270 = vld [vmem:[%s237 + $0x4c] sm:$0xf]
      %v271 = vld [vmem:[%s237 + $0x50] sm:$0xf]
      %v272 = vld [vmem:[%s237 + $0x54] sm:$0xf]
      %v273 = vld [vmem:[%s237 + $0x58] sm:$0xf]
      %v274 = vld [vmem:[%s237 + $0x5c] sm:$0xf]
      %v275 = vld [vmem:[%s237 + $0x60] sm:$0xf]
      %v276 = vld [vmem:[%s237 + $0x64] sm:$0xf]
      %v277 = vld [vmem:[%s237 + $0x68] sm:$0xf]
      %v278 = vld [vmem:[%s237 + $0x6c] sm:$0xf]
      %v279 = vld [vmem:[%s237 + $0x70] sm:$0xf]
      %v280 = vld [vmem:[%s237 + $0x74] sm:$0xf]
      %v281 = vld [vmem:[%s237 + $0x78] sm:$0xf]
      %v282 = vld [vmem:[%s237 + $0x7c] sm:$0xf]
      %v283 = vld [vmem:[%s2] sm:$0xf]
      %v284 = vld [vmem:[%s2 + $0x4] sm:$0xf]
      %v285 = vld [vmem:[%s2 + $0x8] sm:$0xf]
      %v286 = vld [vmem:[%s2 + $0xc] sm:$0xf]
      %v287 = vld [vmem:[%s2 + $0x10] sm:$0xf]
      %v288 = vld [vmem:[%s2 + $0x14] sm:$0xf]
      %v289 = vld [vmem:[%s2 + $0x18] sm:$0xf]
      %v290 = vld [vmem:[%s2 + $0x1c] sm:$0xf]
      %v291 = vld [vmem:[%s2 + $0x20] sm:$0xf]
      %v292 = vld [vmem:[%s2 + $0x24] sm:$0xf]
      %v293 = vld [vmem:[%s2 + $0x28] sm:$0xf]
      %v294 = vld [vmem:[%s2 + $0x2c] sm:$0xf]
      %v295 = vld [vmem:[%s2 + $0x30] sm:$0xf]
      %v296 = vld [vmem:[%s2 + $0x34] sm:$0xf]
      %v297 = vld [vmem:[%s2 + $0x38] sm:$0xf]
      %v298 = vld [vmem:[%s2 + $0x3c] sm:$0xf]
      %v331 = vunpack.c.l.b16 %v251
      %v332 = vunpack.c.l.b16 %v252
      %v333 = vunpack.c.l.b16 %v253
      %v334 = vunpack.c.l.b16 %v254
      %v335 = vunpack.c.l.b16 %v255
      %v336 = vunpack.c.l.b16 %v256
      %v337 = vunpack.c.l.b16 %v257
      %v338 = vunpack.c.l.b16 %v258
      %v339 = vunpack.c.l.b16 %v259
      %v340 = vunpack.c.l.b16 %v260
      %v341 = vunpack.c.l.b16 %v261
      %v342 = vunpack.c.l.b16 %v262
      %v343 = vunpack.c.l.b16 %v263
      %v344 = vunpack.c.l.b16 %v264
      %v345 = vunpack.c.l.b16 %v265
      %v346 = vunpack.c.l.b16 %v266
      %v347 = vunpack.c.l.b16 %v267
      %v348 = vunpack.c.l.b16 %v268
      %v349 = vunpack.c.l.b16 %v269
      %v350 = vunpack.c.l.b16 %v270
      %v351 = vunpack.c.l.b16 %v271
      %v352 = vunpack.c.l.b16 %v272
      %v353 = vunpack.c.l.b16 %v273
      %v354 = vunpack.c.l.b16 %v274
      %v355 = vunpack.c.l.b16 %v275
      %v356 = vunpack.c.l.b16 %v276
      %v357 = vunpack.c.l.b16 %v277
      %v358 = vunpack.c.l.b16 %v278
      %v359 = vunpack.c.l.b16 %v279
      %v360 = vunpack.c.l.b16 %v280
      %v361 = vunpack.c.l.b16 %v281
      %v362 = vunpack.c.l.b16 %v282
      %v363 = vpack.c.b16 %v332, %v331
      %v364 = vpack.c.b16 %v334, %v333
      %v365 = vpack.c.b16 %v336, %v335
      %v366 = vpack.c.b16 %v338, %v337
      %v367 = vpack.c.b16 %v340, %v339
      %v368 = vpack.c.b16 %v342, %v341
      %v369 = vpack.c.b16 %v344, %v343
      %v370 = vpack.c.b16 %v346, %v345
      %v371 = vpack.c.b16 %v348, %v347
      %v372 = vpack.c.b16 %v350, %v349
      %v373 = vpack.c.b16 %v352, %v351
      %v374 = vpack.c.b16 %v354, %v353
      %v375 = vpack.c.b16 %v356, %v355
      %v376 = vpack.c.b16 %v358, %v357
      %v377 = vpack.c.b16 %v360, %v359
      %v378 = vpack.c.b16 %v362, %v361
      %v411 = vunpack.c.l.b16 %v283
      %v412 = vunpack.c.l.b16 %v284
      %v413 = vunpack.c.l.b16 %v285
      %v414 = vunpack.c.l.b16 %v286
      %v415 = vunpack.c.l.b16 %v287
      %v416 = vunpack.c.l.b16 %v288
      %v417 = vunpack.c.l.b16 %v289
      %v418 = vunpack.c.l.b16 %v290
      %v419 = vunpack.c.l.b16 %v291
      %v420 = vunpack.c.l.b16 %v292
      %v421 = vunpack.c.l.b16 %v293
      %v422 = vunpack.c.l.b16 %v294
      %v423 = vunpack.c.l.b16 %v295
      %v424 = vunpack.c.l.b16 %v296
      %v425 = vunpack.c.l.b16 %v297
      %v426 = vunpack.c.l.b16 %v298
      %v427 = vpack.c.b16 %v412, %v411
      %v428 = vpack.c.b16 %v414, %v413
      %v429 = vpack.c.b16 %v416, %v415
      %v430 = vpack.c.b16 %v418, %v417
      %v431 = vpack.c.b16 %v420, %v419
      %v432 = vpack.c.b16 %v422, %v421
      %v433 = vpack.c.b16 %v424, %v423
      %v434 = vpack.c.b16 %v426, %v425
      %443 = vmatpush.bf16.msra.mxu0 %v434
      %444 = vmatpush.bf16.msra.mxu0 %v433
      %445 = vmatpush.bf16.msra.mxu0 %v432
      %446 = vmatpush.bf16.msra.mxu0 %v431
      %447 = vmatpush.bf16.msra.mxu0 %v430
      %448 = vmatpush.bf16.msra.mxu0 %v429
      %449 = vmatpush.bf16.msra.mxu0 %v428
      %450 = vmatpush.bf16.msra.mxu0 %v427
      %451 = vmatmul.bf16.gmra.mxu0 %v363
      %v452 = vpop.f32.mrf.mxu0
      %v453 = vadd.f32 0.0, %v452
      %v454 = vpop.f32.mrf.mxu0
      %v455 = vadd.f32 0.0, %v454
      %456 = vmatmul.bf16.gmra.mxu0 %v364
      %v457 = vpop.f32.mrf.mxu0
      %v458 = vadd.f32 0.0, %v457
      %v459 = vpop.f32.mrf.mxu0
      %v460 = vadd.f32 0.0, %v459
      %461 = vmatmul.bf16.gmra.mxu0 %v365
      %v462 = vpop.f32.mrf.mxu0
      %v463 = vadd.f32 0.0, %v462
      %v464 = vpop.f32.mrf.mxu0
      %v465 = vadd.f32 0.0, %v464
      %466 = vmatmul.bf16.gmra.mxu0 %v366
      %v467 = vpop.f32.mrf.mxu0
      %v468 = vadd.f32 0.0, %v467
      %v469 = vpop.f32.mrf.mxu0
      %v470 = vadd.f32 0.0, %v469
      %471 = vmatmul.bf16.gmra.mxu0 %v367
      %v472 = vpop.f32.mrf.mxu0
      %v473 = vadd.f32 0.0, %v472
      %v474 = vpop.f32.mrf.mxu0
      %v475 = vadd.f32 0.0, %v474
      %476 = vmatmul.bf16.gmra.mxu0 %v368
      %v477 = vpop.f32.mrf.mxu0
      %v478 = vadd.f32 0.0, %v477
      %v479 = vpop.f32.mrf.mxu0
      %v480 = vadd.f32 0.0, %v479
      %481 = vmatmul.bf16.gmra.mxu0 %v369
      %v482 = vpop.f32.mrf.mxu0
      %v483 = vadd.f32 0.0, %v482
      %v484 = vpop.f32.mrf.mxu0
      %v485 = vadd.f32 0.0, %v484
      %486 = vmatmul.bf16.gmra.mxu0 %v370
      %v487 = vpop.f32.mrf.mxu0
      %v488 = vadd.f32 0.0, %v487
      %v489 = vpop.f32.mrf.mxu0
      %v490 = vadd.f32 0.0, %v489
      %491 = vmatmul.bf16.gmra.mxu0 %v371
      %v492 = vpop.f32.mrf.mxu0
      %v493 = vadd.f32 0.0, %v492
      %v494 = vpop.f32.mrf.mxu0
      %v495 = vadd.f32 0.0, %v494
      %496 = vmatmul.bf16.gmra.mxu0 %v372
      %v497 = vpop.f32.mrf.mxu0
      %v498 = vadd.f32 0.0, %v497
      %v499 = vpop.f32.mrf.mxu0
      %v500 = vadd.f32 0.0, %v499
      %501 = vmatmul.bf16.gmra.mxu0 %v373
      %v502 = vpop.f32.mrf.mxu0
      %v503 = vadd.f32 0.0, %v502
      %v504 = vpop.f32.mrf.mxu0
      %v505 = vadd.f32 0.0, %v504
      %506 = vmatmul.bf16.gmra.mxu0 %v374
      %v507 = vpop.f32.mrf.mxu0
      %v508 = vadd.f32 0.0, %v507
      %v509 = vpop.f32.mrf.mxu0
      %v510 = vadd.f32 0.0, %v509
      %511 = vmatmul.bf16.gmra.mxu0 %v375
      %v512 = vpop.f32.mrf.mxu0
      %v513 = vadd.f32 0.0, %v512
      %v514 = vpop.f32.mrf.mxu0
      %v515 = vadd.f32 0.0, %v514
      %516 = vmatmul.bf16.gmra.mxu0 %v376
      %v517 = vpop.f32.mrf.mxu0
      %v518 = vadd.f32 0.0, %v517
      %v519 = vpop.f32.mrf.mxu0
      %v520 = vadd.f32 0.0, %v519
      %521 = vmatmul.bf16.gmra.mxu0 %v377
      %v522 = vpop.f32.mrf.mxu0
      %v523 = vadd.f32 0.0, %v522
      %v524 = vpop.f32.mrf.mxu0
      %v525 = vadd.f32 0.0, %v524
      %526 = vmatmul.bf16.gmra.mxu0 %v378
      %v527 = vpop.f32.mrf.mxu0
      %v528 = vadd.f32 0.0, %v527
      %v529 = vpop.f32.mrf.mxu0
      %v530 = vadd.f32 0.0, %v529
      %531 = vdwg.mxu0
      %s532 = sld [smem:[#allocation2]]
      %v533 = vstv %s532
      %v534 = vmul.f32 %v453, %v533
      %v535 = vmul.f32 %v455, %v533
      %v536 = vmul.f32 %v458, %v533
      %v537 = vmul.f32 %v460, %v533
      %v538 = vmul.f32 %v463, %v533
      %v539 = vmul.f32 %v465, %v533
      %v540 = vmul.f32 %v468, %v533
      %v541 = vmul.f32 %v470, %v533
      %v542 = vmul.f32 %v473, %v533
      %v543 = vmul.f32 %v475, %v533
      %v544 = vmul.f32 %v478, %v533
      %v545 = vmul.f32 %v480, %v533
      %v546 = vmul.f32 %v483, %v533
      %v547 = vmul.f32 %v485, %v533
      %v548 = vmul.f32 %v488, %v533
      %v549 = vmul.f32 %v490, %v533
      %v550 = vmul.f32 %v493, %v533
      %v551 = vmul.f32 %v495, %v533
      %v552 = vmul.f32 %v498, %v533
      %v553 = vmul.f32 %v500, %v533
      %v554 = vmul.f32 %v503, %v533
      %v555 = vmul.f32 %v505, %v533
      %v556 = vmul.f32 %v508, %v533
      %v557 = vmul.f32 %v510, %v533
      %v558 = vmul.f32 %v513, %v533
      %v559 = vmul.f32 %v515, %v533
      %v560 = vmul.f32 %v518, %v533
      %v561 = vmul.f32 %v520, %v533
      %v562 = vmul.f32 %v523, %v533
      %v563 = vmul.f32 %v525, %v533
      %v564 = vmul.f32 %v528, %v533
      %v565 = vmul.f32 %v530, %v533
      %v566 = vld [vmem:[%s3] sm:$0x1]
      %v568 = vperm.slane %v566, 0
      %v570 = vadd.f32 %v534, %v568
      %v571 = vadd.f32 %v535, %v568
      %v572 = vadd.f32 %v536, %v568
      %v573 = vadd.f32 %v537, %v568
      %v574 = vadd.f32 %v538, %v568
      %v575 = vadd.f32 %v539, %v568
      %v576 = vadd.f32 %v540, %v568
      %v577 = vadd.f32 %v541, %v568
      %v578 = vadd.f32 %v542, %v568
      %v579 = vadd.f32 %v543, %v568
      %v580 = vadd.f32 %v544, %v568
      %v581 = vadd.f32 %v545, %v568
      %v582 = vadd.f32 %v546, %v568
      %v583 = vadd.f32 %v547, %v568
      %v584 = vadd.f32 %v548, %v568
      %v585 = vadd.f32 %v549, %v568
      %v586 = vadd.f32 %v550, %v568
      %v587 = vadd.f32 %v551, %v568
      %v588 = vadd.f32 %v552, %v568
      %v589 = vadd.f32 %v553, %v568
      %v590 = vadd.f32 %v554, %v568
      %v591 = vadd.f32 %v555, %v568
      %v592 = vadd.f32 %v556, %v568
      %v593 = vadd.f32 %v557, %v568
      %v594 = vadd.f32 %v558, %v568
      %v595 = vadd.f32 %v559, %v568
      %v596 = vadd.f32 %v560, %v568
      %v597 = vadd.f32 %v561, %v568
      %v598 = vadd.f32 %v562, %v568
      %v599 = vadd.f32 %v563, %v568
      %v600 = vadd.f32 %v564, %v568
      %v601 = vadd.f32 %v565, %v568
      %v602 = vld [vmem:[%s243] sm:$0xff]
      %v603 = vld [vmem:[%s243 + $0x8] sm:$0xff]
      %v604 = vld [vmem:[%s243 + $0x10] sm:$0xff]
      %v605 = vld [vmem:[%s243 + $0x18] sm:$0xff]
      %v606 = vld [vmem:[%s243 + $0x20] sm:$0xff]
      %v607 = vld [vmem:[%s243 + $0x28] sm:$0xff]
      %v608 = vld [vmem:[%s243 + $0x30] sm:$0xff]
      %v609 = vld [vmem:[%s243 + $0x38] sm:$0xff]
      %v610 = vld [vmem:[%s243 + $0x40] sm:$0xff]
      %v611 = vld [vmem:[%s243 + $0x48] sm:$0xff]
      %v612 = vld [vmem:[%s243 + $0x50] sm:$0xff]
      %v613 = vld [vmem:[%s243 + $0x58] sm:$0xff]
      %v614 = vld [vmem:[%s243 + $0x60] sm:$0xff]
      %v615 = vld [vmem:[%s243 + $0x68] sm:$0xff]
      %v616 = vld [vmem:[%s243 + $0x70] sm:$0xff]
      %v617 = vld [vmem:[%s243 + $0x78] sm:$0xff]
      %v618 = vld [vmem:[%s243 + $0x80] sm:$0xff]
      %v619 = vld [vmem:[%s243 + $0x88] sm:$0xff]
      %v620 = vld [vmem:[%s243 + $0x90] sm:$0xff]
      %v621 = vld [vmem:[%s243 + $0x98] sm:$0xff]
      %v622 = vld [vmem:[%s243 + $0xa0] sm:$0xff]
      %v623 = vld [vmem:[%s243 + $0xa8] sm:$0xff]
      %v624 = vld [vmem:[%s243 + $0xb0] sm:$0xff]
      %v625 = vld [vmem:[%s243 + $0xb8] sm:$0xff]
      %v626 = vld [vmem:[%s243 + $0xc0] sm:$0xff]
      %v627 = vld [vmem:[%s243 + $0xc8] sm:$0xff]
      %v628 = vld [vmem:[%s243 + $0xd0] sm:$0xff]
      %v629 = vld [vmem:[%s243 + $0xd8] sm:$0xff]
      %v630 = vld [vmem:[%s243 + $0xe0] sm:$0xff]
      %v631 = vld [vmem:[%s243 + $0xe8] sm:$0xff]
      %v632 = vld [vmem:[%s243 + $0xf0] sm:$0xff]
      %v633 = vld [vmem:[%s243 + $0xf8] sm:$0xff]
      %635 = vset.pattern.permute.xlu0 0
      %636 = vperm.xlu0 %635, %v602
      %v637 = vpop.permute.xlu0 %636
      %640 = vset.pattern.permute.xlu0 0
      %641 = vperm.xlu0 %640, %v603
      %v642 = vpop.permute.xlu0 %641
      %645 = vset.pattern.permute.xlu0 0
      %646 = vperm.xlu0 %645, %v604
      %v647 = vpop.permute.xlu0 %646
      %650 = vset.pattern.permute.xlu0 0
      %651 = vperm.xlu0 %650, %v605
      %v652 = vpop.permute.xlu0 %651
      %655 = vset.pattern.permute.xlu0 0
      %656 = vperm.xlu0 %655, %v606
      %v657 = vpop.permute.xlu0 %656
      %660 = vset.pattern.permute.xlu0 0
      %661 = vperm.xlu0 %660, %v607
      %v662 = vpop.permute.xlu0 %661
      %665 = vset.pattern.permute.xlu0 0
      %666 = vperm.xlu0 %665, %v608
      %v667 = vpop.permute.xlu0 %666
      %670 = vset.pattern.permute.xlu0 0
      %671 = vperm.xlu0 %670, %v609
      %v672 = vpop.permute.xlu0 %671
      %675 = vset.pattern.permute.xlu0 0
      %676 = vperm.xlu0 %675, %v610
      %v677 = vpop.permute.xlu0 %676
      %680 = vset.pattern.permute.xlu0 0
      %681 = vperm.xlu0 %680, %v611
      %v682 = vpop.permute.xlu0 %681
      %685 = vset.pattern.permute.xlu0 0
      %686 = vperm.xlu0 %685, %v612
      %v687 = vpop.permute.xlu0 %686
      %690 = vset.pattern.permute.xlu0 0
      %691 = vperm.xlu0 %690, %v613
      %v692 = vpop.permute.xlu0 %691
      %695 = vset.pattern.permute.xlu0 0
      %696 = vperm.xlu0 %695, %v614
      %v697 = vpop.permute.xlu0 %696
      %700 = vset.pattern.permute.xlu0 0
      %701 = vperm.xlu0 %700, %v615
      %v702 = vpop.permute.xlu0 %701
      %705 = vset.pattern.permute.xlu0 0
      %706 = vperm.xlu0 %705, %v616
      %v707 = vpop.permute.xlu0 %706
      %710 = vset.pattern.permute.xlu0 0
      %711 = vperm.xlu0 %710, %v617
      %v712 = vpop.permute.xlu0 %711
      %715 = vset.pattern.permute.xlu0 0
      %716 = vperm.xlu0 %715, %v618
      %v717 = vpop.permute.xlu0 %716
      %720 = vset.pattern.permute.xlu0 0
      %721 = vperm.xlu0 %720, %v619
      %v722 = vpop.permute.xlu0 %721
      %725 = vset.pattern.permute.xlu0 0
      %726 = vperm.xlu0 %725, %v620
      %v727 = vpop.permute.xlu0 %726
      %730 = vset.pattern.permute.xlu0 0
      %731 = vperm.xlu0 %730, %v621
      %v732 = vpop.permute.xlu0 %731
      %735 = vset.pattern.permute.xlu0 0
      %736 = vperm.xlu0 %735, %v622
      %v737 = vpop.permute.xlu0 %736
      %740 = vset.pattern.permute.xlu0 0
      %741 = vperm.xlu0 %740, %v623
      %v742 = vpop.permute.xlu0 %741
      %745 = vset.pattern.permute.xlu0 0
      %746 = vperm.xlu0 %745, %v624
      %v747 = vpop.permute.xlu0 %746
      %750 = vset.pattern.permute.xlu0 0
      %751 = vperm.xlu0 %750, %v625
      %v752 = vpop.permute.xlu0 %751
      %755 = vset.pattern.permute.xlu0 0
      %756 = vperm.xlu0 %755, %v626
      %v757 = vpop.permute.xlu0 %756
      %760 = vset.pattern.permute.xlu0 0
      %761 = vperm.xlu0 %760, %v627
      %v762 = vpop.permute.xlu0 %761
      %765 = vset.pattern.permute.xlu0 0
      %766 = vperm.xlu0 %765, %v628
      %v767 = vpop.permute.xlu0 %766
      %770 = vset.pattern.permute.xlu0 0
      %771 = vperm.xlu0 %770, %v629
      %v772 = vpop.permute.xlu0 %771
      %775 = vset.pattern.permute.xlu0 0
      %776 = vperm.xlu0 %775, %v630
      %v777 = vpop.permute.xlu0 %776
      %780 = vset.pattern.permute.xlu0 0
      %781 = vperm.xlu0 %780, %v631
      %v782 = vpop.permute.xlu0 %781
      %785 = vset.pattern.permute.xlu0 0
      %786 = vperm.xlu0 %785, %v632
      %v787 = vpop.permute.xlu0 %786
      %790 = vset.pattern.permute.xlu0 0
      %791 = vperm.xlu0 %790, %v633
      %v792 = vpop.permute.xlu0 %791
      %v794 = vmul.f32 %v570, %v637
      %v795 = vmul.f32 %v571, %v642
      %v796 = vmul.f32 %v572, %v647
      %v797 = vmul.f32 %v573, %v652
      %v798 = vmul.f32 %v574, %v657
      %v799 = vmul.f32 %v575, %v662
      %v800 = vmul.f32 %v576, %v667
      %v801 = vmul.f32 %v577, %v672
      %v802 = vmul.f32 %v578, %v677
      %v803 = vmul.f32 %v579, %v682
      %v804 = vmul.f32 %v580, %v687
      %v805 = vmul.f32 %v581, %v692
      %v806 = vmul.f32 %v582, %v697
      %v807 = vmul.f32 %v583, %v702
      %v808 = vmul.f32 %v584, %v707
      %v809 = vmul.f32 %v585, %v712
      %v810 = vmul.f32 %v586, %v717
      %v811 = vmul.f32 %v587, %v722
      %v812 = vmul.f32 %v588, %v727
      %v813 = vmul.f32 %v589, %v732
      %v814 = vmul.f32 %v590, %v737
      %v815 = vmul.f32 %v591, %v742
      %v816 = vmul.f32 %v592, %v747
      %v817 = vmul.f32 %v593, %v752
      %v818 = vmul.f32 %v594, %v757
      %v819 = vmul.f32 %v595, %v762
      %v820 = vmul.f32 %v596, %v767
      %v821 = vmul.f32 %v597, %v772
      %v822 = vmul.f32 %v598, %v777
      %v823 = vmul.f32 %v599, %v782
      %v824 = vmul.f32 %v600, %v787
      %v825 = vmul.f32 %v601, %v792
      %826 = vst [vmem:[%s249] sm:$0xff] %v794
      %827 = vst [vmem:[%s249 + $0x8] sm:$0xff] %v795
      %828 = vst [vmem:[%s249 + $0x10] sm:$0xff] %v796
      %829 = vst [vmem:[%s249 + $0x18] sm:$0xff] %v797
      %830 = vst [vmem:[%s249 + $0x20] sm:$0xff] %v798
      %831 = vst [vmem:[%s249 + $0x28] sm:$0xff] %v799
      %832 = vst [vmem:[%s249 + $0x30] sm:$0xff] %v800
      %833 = vst [vmem:[%s249 + $0x38] sm:$0xff] %v801
      %834 = vst [vmem:[%s249 + $0x40] sm:$0xff] %v802
      %835 = vst [vmem:[%s249 + $0x48] sm:$0xff] %v803
      %836 = vst [vmem:[%s249 + $0x50] sm:$0xff] %v804
      %837 = vst [vmem:[%s249 + $0x58] sm:$0xff] %v805
      %838 = vst [vmem:[%s249 + $0x60] sm:$0xff] %v806
      %839 = vst [vmem:[%s249 + $0x68] sm:$0xff] %v807
      %840 = vst [vmem:[%s249 + $0x70] sm:$0xff] %v808
      %841 = vst [vmem:[%s249 + $0x78] sm:$0xff] %v809
      %842 = vst [vmem:[%s249 + $0x80] sm:$0xff] %v810
      %843 = vst [vmem:[%s249 + $0x88] sm:$0xff] %v811
      %844 = vst [vmem:[%s249 + $0x90] sm:$0xff] %v812
      %845 = vst [vmem:[%s249 + $0x98] sm:$0xff] %v813
      %846 = vst [vmem:[%s249 + $0xa0] sm:$0xff] %v814
      %847 = vst [vmem:[%s249 + $0xa8] sm:$0xff] %v815
      %848 = vst [vmem:[%s249 + $0xb0] sm:$0xff] %v816
      %849 = vst [vmem:[%s249 + $0xb8] sm:$0xff] %v817
      %850 = vst [vmem:[%s249 + $0xc0] sm:$0xff] %v818
      %851 = vst [vmem:[%s249 + $0xc8] sm:$0xff] %v819
      %852 = vst [vmem:[%s249 + $0xd0] sm:$0xff] %v820
      %853 = vst [vmem:[%s249 + $0xd8] sm:$0xff] %v821
      %854 = vst [vmem:[%s249 + $0xe0] sm:$0xff] %v822
      %855 = vst [vmem:[%s249 + $0xe8] sm:$0xff] %v823
      %856 = vst [vmem:[%s249 + $0xf0] sm:$0xff] %v824
      %857 = vst [vmem:[%s249 + $0xf8] sm:$0xff] %v825
      %s858 = smul.u32 32, %s17
      %p859 = scmp.lt.s32.totalorder %s858, 63
      %s860 = scalar_select %p859, %s858, 63
      %s861 = smul.addr %s860, 8
      %s862 = scalar_lea.vmem %s5, %s861
      // Predicated region
      $region41: #{partial_conv.1} parent=39 // pred_check
        %p863 = pneg %p150
      $region42: #{partial_conv.1} parent=39 // pred_check_branch
        %865 = sbr.rel (%p863) target = $region44
      $region43: #{partial_conv.1} parent=39 // pred_region
        %s866 = smul.u32 32, %s17
      $region44: #{partial_conv.1} parent=39 // pred_fallthru
        _
    $region40: #{partial_conv.1} parent=5 // pred_fallthru
      _
    %p867 = scmp.le.s32.totalorder 2, %s12
    // Predicated region
    $region45: #{partial_conv.1} parent=5 // pred_check
      %p868 = pneg %p867
    $region46: #{partial_conv.1} parent=5 // pred_check_branch
      %870 = sbr.rel (%p868) target = $region48
    $region47: #{partial_conv.1} parent=5 // pred_region
      %s871 = ssub.s32 %s12, 2
      // Predicated region
      $region49: #{partial_conv.1} parent=47 // pred_check
        %p872 = pneg %p156
      $region50: #{partial_conv.1} parent=47 // pred_check_branch
        %874 = sbr.rel (%p872) target = $region52
      $region51: #{partial_conv.1} parent=47 // pred_region
        %s875 = smul.u32 32, %s18
        %p876 = scmp.lt.s32.totalorder %s875, 63
        %s877 = scalar_select %p876, %s875, 63
        %s878 = smul.addr %s877, 8
        %s879 = scalar_lea.vmem %s5, %s878
      $region52: #{partial_conv.1} parent=47 // pred_fallthru
        _
    $region48: #{partial_conv.1} parent=5 // pred_fallthru
      _
  $region6: #{partial_conv.1} parent=0 // loop_footer
    %s16 = sadd.s32 1, %s12
  $region7: #{partial_conv.1} parent=0 // loop_footer_branch
    %11 = sbr.rel target = $region3
  $region8: #{partial_conv.1} parent=0 // loop_exit
    _

</llo_original>
